<compile_context>
chip_gen: v5e
topology: v5e:2x2
jax: 0.10.0
libtpu: 0.0.40
codegen_flags: <defaults>
</compile_context>

<pallas_src>
import functools
import math

import numpy as np
import jax
import jax.numpy as jnp
from jax.experimental import pallas as pl
from jax.experimental.pallas import tpu as pltpu


_VMEM_LIMIT = 32 * 1024 * 1024  # safe on v5e/v6e (128 MiB phys) and v7x (64 MiB phys)


# ----------------------------------------------------------------------------
# Pallas kernels (hot paths)
# ----------------------------------------------------------------------------

def _cmul_bcast_kernel(xr_ref, xi_ref, ar_ref, ai_ref, or_ref, oi_ref):
    """Complex multiply of a batched field block by a broadcast plane block.

    xr/xi: (TILE_B, TILE_P) field block.
    ar/ai: (1, TILE_P) plane block (transfer function H or SLM phase factor),
           broadcast across the batch sublanes.
    """
    xr = xr_ref[...]
    xi = xi_ref[...]
    ar = ar_ref[...]
    ai = ai_ref[...]
    or_ref[...] = xr * ar - xi * ai
    oi_ref[...] = xr * ai + xi * ar


def _cmos_kernel(xr_ref, xi_ref, mask_ref, out_ref, acc_ref):
    """CMOS: intensity |E|^2 then per-class detector-region sum as a matmul.

    Grid = (batch tiles, K tiles); K (=grid_num^2) is the reduction axis.
    xr/xi: (TILE_B, TILE_K); mask: (TILE_K, C_pad) with C_pad a multiple of 128.
    """
    k = pl.program_id(1)

    @pl.when(k == 0)
    def _():
        acc_ref[...] = jnp.zeros_like(acc_ref)

    r = xr_ref[...]
    i = xi_ref[...]
    inten = r * r + i * i
    acc_ref[...] += jnp.dot(inten, mask_ref[...],
                            preferred_element_type=jnp.float32)

    @pl.when(k == pl.num_programs(1) - 1)
    def _():
        out_ref[...] = acc_ref[...]


# ----------------------------------------------------------------------------
# Tiling helpers + Pallas wrappers
# ----------------------------------------------------------------------------

def _pick_tile(n, mult, cap):
    """Largest divisor of n that is a multiple of `mult` and <= cap.

    Falls back to the full dimension (always legal for BlockSpec) when n is
    not a multiple of `mult`.
    """
    if n % mult != 0:
        return n
    best = mult
    d = mult
    limit = min(n, cap)
    while d <= limit:
        if n % d == 0:
            best = d
        d += mult
    return best


def _batch_tile(B, cap=8):
    # Second-to-last block dim must be a multiple of 8 or the full dimension.
    return cap if (B % 8 == 0 and B >= cap) else B


def complex_mul_bcast(xr, xi, ar, ai):
    """(xr + i xi) * (ar + i ai) with (ar, ai) broadcast over the batch."""
    B, P = xr.shape
    ar2 = ar.reshape(1, P).astype(jnp.float32)
    ai2 = ai.reshape(1, P).astype(jnp.float32)

    tile_b = _batch_tile(B)
    tile_p = _pick_tile(P, 128, 32 * 1024)   # ~1 MiB f32 block at tile_b=8
    grid = (B // tile_b, P // tile_p)

    fld = pl.BlockSpec((tile_b, tile_p), lambda b, p: (b, p))
    pln = pl.BlockSpec((1, tile_p), lambda b, p: (0, p))
    out_shape = (jax.ShapeDtypeStruct((B, P), jnp.float32),
                 jax.ShapeDtypeStruct((B, P), jnp.float32))

    return pl.pallas_call(
        _cmul_bcast_kernel,
        out_shape=out_shape,
        grid=grid,
        in_specs=[fld, fld, pln, pln],
        out_specs=(fld, fld),
        compiler_params=pltpu.CompilerParams(
            dimension_semantics=("parallel", "parallel"),
            vmem_limit_bytes=_VMEM_LIMIT),
    )(xr, xi, ar2, ai2)


def cmos_readout(xr_flat, xi_flat, masks_padded):
    """Intensity + detector-region reduction.  Output has the padded class dim."""
    B, K = xr_flat.shape
    Cp = masks_padded.shape[1]               # padded to a multiple of 128

    tile_b = _batch_tile(B)
    tile_k = _pick_tile(K, 128, 4096)
    grid = (B // tile_b, K // tile_k)

    x_spec = pl.BlockSpec((tile_b, tile_k), lambda b, k: (b, k))
    m_spec = pl.BlockSpec((tile_k, Cp), lambda b, k: (k, 0))
    o_spec = pl.BlockSpec((tile_b, Cp), lambda b, k: (b, 0))

    return pl.pallas_call(
        _cmos_kernel,
        out_shape=jax.ShapeDtypeStruct((B, Cp), jnp.float32),
        grid=grid,
        in_specs=[x_spec, x_spec, m_spec],
        out_specs=o_spec,
        scratch_shapes=[pltpu.VMEM((tile_b, Cp), jnp.float32)],
        compiler_params=pltpu.CompilerParams(
            dimension_semantics=("parallel", "arbitrary"),
            vmem_limit_bytes=_VMEM_LIMIT),
    )(xr_flat, xi_flat, masks_padded)


# ----------------------------------------------------------------------------
# Precomputed optical factors (hoisted out of the per-batch hot path)
# ----------------------------------------------------------------------------

@functools.lru_cache(maxsize=None)
def asm_transfer(Np, grid_size, wl, z):
    """Angular-spectrum transfer function H(fx,fy; wl,z), flattened, f32.

    Built once per (Np, grid_size, wl, z) on the host in float64 with the
    propagation phase reduced mod 2*pi BEFORE cos/sin (kz*z is ~1e5 rad, far
    beyond reliable f32 range reduction).
    """
    fx = np.fft.fftfreq(Np, d=grid_size).astype(np.float64)
    fsq = fx[:, None] ** 2 + fx[None, :] ** 2
    arg = 1.0 - (wl * wl) * fsq
    k = 2.0 * np.pi / wl
    prop = arg >= 0.0
    kz = k * np.sqrt(np.maximum(arg, 0.0))
    kappa = k * np.sqrt(np.maximum(-arg, 0.0))
    amp = np.where(prop, 1.0, np.exp(-kappa * z))          # evanescent decay
    ph = np.where(prop, np.mod(kz * z, 2.0 * np.pi), 0.0)  # f64 range reduction
    hr = (amp * np.cos(ph)).astype(np.float32).reshape(-1)
    hi = (amp * np.sin(ph)).astype(np.float32).reshape(-1)
    return jnp.asarray(hr), jnp.asarray(hi)


def build_slm_factors(height, grid_num, padded_num, wl):
    """Per-layer SLM phase factor exp(i*2*pi*h/wl) as (cos, sin) planes.

    Computed once per layer per forward (not per batch item).  Heights are a
    fraction of a wavelength, so the f32 phase argument stays small.
    """
    rep = grid_num // height.shape[0]
    h = jnp.repeat(jnp.repeat(height, rep, axis=0), rep, axis=1)
    pad = (padded_num - grid_num) // 2
    h = jnp.pad(h, ((pad, pad), (pad, pad))).astype(jnp.float32)
    ph = (2.0 * jnp.pi / wl) * h
    return jnp.cos(ph).reshape(-1), jnp.sin(ph).reshape(-1)


def build_cmos_masks(classes, grid_num, frame_ratio, lane_pad=128):
    # Class detectors on a ceil(sqrt(C)) x ceil(sqrt(C)) lattice over the
    # central grid; each detector is a square window of size frame_ratio*cell.
    # Class dimension is zero-padded to a multiple of 128 for a lane-dense
    # MXU output block; logits are sliced back to `classes` afterwards.
    # TODO(synk): exact detector layout of the original CMOS module is unknown.
    side = int(math.ceil(math.sqrt(classes)))
    cell = grid_num // side
    win = max(1, int(round(frame_ratio * cell)))
    c_pad = ((classes + lane_pad - 1) // lane_pad) * lane_pad
    masks = np.zeros((grid_num, grid_num, c_pad), dtype=np.float32)
    for c in range(classes):
        gr, gc = divmod(c, side)
        r0 = gr * cell + (cell - win) // 2
        c0 = gc * cell + (cell - win) // 2
        masks[r0:r0 + win, c0:c0 + win, c] = 1.0
    return jnp.asarray(masks.reshape(grid_num * grid_num, c_pad))


# ----------------------------------------------------------------------------
# Glue (plain JAX): DMD, padding, FFTs
# ----------------------------------------------------------------------------

def dmd(X):
    # DMD amplitude modulation: image (B, 1, gn, gn) -> real field amplitude.
    # TODO(synk): original DMD may resize (load_resize != 1); here load_resize=1.
    xr = X[:, 0, :, :].astype(jnp.float32)
    xi = jnp.zeros_like(xr)
    return xr, xi


def zero_padding(xr, xi, pad_ratio, grid_num):
    pad = int(round(grid_num * pad_ratio)) // 2     # padding per side
    pw = ((0, 0), (pad, pad), (pad, pad))
    return jnp.pad(xr, pw), jnp.pad(xi, pw)


def propagate(xr, xi, Hr, Hi, Np):
    """Angular spectrum method.  FFT2/IFFT2 stay in XLA (no Pallas FFT on TPU);
    the precomputed-H complex multiply runs in the Pallas kernel."""
    B = xr.shape[0]
    f = (xr + 1j * xi).reshape(B, Np, Np).astype(jnp.complex64)
    F = jnp.fft.fft2(f)
    Fr = jnp.real(F).reshape(B, -1).astype(jnp.float32)
    Fi = jnp.imag(F).reshape(B, -1).astype(jnp.float32)
    # TODO(synk): the complex<->split conversions around the XLA FFT add full-
    # field HBM passes; an interleaved/bitcast-layout kernel could remove them.
    Gr, Gi = complex_mul_bcast(Fr, Fi, Hr, Hi)
    g = jnp.fft.ifft2((Gr + 1j * Gi).reshape(B, Np, Np).astype(jnp.complex64))
    gr = jnp.real(g).reshape(B, -1).astype(jnp.float32)
    gi = jnp.imag(g).reshape(B, -1).astype(jnp.float32)
    return gr, gi


def d2nn_forward(params, X, wl):
    grid_num = params["grid_num"]
    grid_size = float(params["grid_size"])
    pad_ratio = params["pad_ratio"]
    zs = params["zs"]
    classes = params["classes"]
    wl = float(wl)

    xr, xi = dmd(X)
    xr, xi = zero_padding(xr, xi, pad_ratio, grid_num)
    B, Np, _ = xr.shape
    xr = xr.reshape(B, Np * Np)
    xi = xi.reshape(B, Np * Np)

    Hr, Hi = asm_transfer(Np, grid_size, wl, float(zs[0]))
    xr, xi = propagate(xr, xi, Hr, Hi, Np)
    for height, z in zip(params["slm_heights"], zs[1:]):
        cr, ci = build_slm_factors(height, grid_num, Np, wl)
        xr, xi = complex_mul_bcast(xr, xi, cr, ci)      # phase-only SLM
        Hr, Hi = asm_transfer(Np, grid_size, wl, float(z))
        xr, xi = propagate(xr, xi, Hr, Hi, Np)

    # CMOS: crop back to the central grid_num x grid_num region, then read out.
    pad = (Np - grid_num) // 2
    cr = xr.reshape(B, Np, Np)[:, pad:pad + grid_num, pad:pad + grid_num]
    ci = xi.reshape(B, Np, Np)[:, pad:pad + grid_num, pad:pad + grid_num]
    logits = cmos_readout(cr.reshape(B, -1), ci.reshape(B, -1),
                          params["cmos_masks"])
    return logits[:, :classes]


# ----------------------------------------------------------------------------
# Main
# ----------------------------------------------------------------------------

if __name__ == "__main__":
    key = jax.random.PRNGKey(0)

    # Small shapes consistent with the module constructor.
    classes = 4
    grid_num = 16            # simulation grid (even, as asserted in __init__)
    slm_pixel_num = 8        # SLM pixels (even)
    grid_size = 8e-6         # pitch of one simulation grid cell [m]
    wl = 532e-9              # wavelength [m]
    num_slm = 1
    zs = [0.02, 0.03]        # len(zs) == num_slm + 1
    pad_ratio = 1
    frame_ratio = 0.3

    k_x, k_h = jax.random.split(key)
    X = jax.random.uniform(k_x, (2, 1, grid_num, grid_num), dtype=jnp.float32)

    # Deterministic SLM "height" parameters (one per SLM layer); phase in [0, 2pi).
    slm_heights = [
        jax.random.uniform(jax.random.fold_in(k_h, i),
                           (slm_pixel_num, slm_pixel_num),
                           dtype=jnp.float32, minval=0.0, maxval=wl)
        for i in range(num_slm)
    ]

    params = dict(
        classes=classes,
        grid_num=grid_num,
        grid_size=grid_size,
        pad_ratio=pad_ratio,
        zs=[float(z) for z in zs],
        slm_heights=slm_heights,
        cmos_masks=build_cmos_masks(classes, grid_num, frame_ratio),
    )

    y = d2nn_forward(params, X, wl)
    y = jax.block_until_ready(y)

    assert y.shape == (2, classes), y.shape
    assert bool(jnp.all(jnp.isfinite(y)))
    print("KERNEL_OK")
</pallas_src>

<mosaic_0001>
module attributes {stable_mosaic.version = 11 : i64} {
  func.func @_cmul_bcast_kernel(%arg0: i32, %arg1: i32, %arg2: memref<2x1024xf32, #tpu.memory_space<vmem>>, %arg3: memref<2x1024xf32, #tpu.memory_space<vmem>>, %arg4: memref<1x1024xf32, #tpu.memory_space<vmem>>, %arg5: memref<1x1024xf32, #tpu.memory_space<vmem>>, %arg6: memref<2x1024xf32, #tpu.memory_space<vmem>>, %arg7: memref<2x1024xf32, #tpu.memory_space<vmem>>) attributes {dimension_semantics = [#tpu.dimension_semantics<parallel>, #tpu.dimension_semantics<parallel>], iteration_bounds = array<i64: 1, 1>, scalar_prefetch = 0 : i64, scratch_operands = 0 : i64, tpu.core_type = #tpu.core_type<tc>, window_params = [{transform_indices = @transform_0, window_bounds = array<i64: 2, 1024>}, {transform_indices = @transform_1, window_bounds = array<i64: 2, 1024>}, {transform_indices = @transform_2, window_bounds = array<i64: 1, 1024>}, {transform_indices = @transform_3, window_bounds = array<i64: 1, 1024>}, {transform_indices = @transform_4, window_bounds = array<i64: 2, 1024>}, {transform_indices = @transform_5, window_bounds = array<i64: 2, 1024>}]} {
    %c0 = arith.constant 0 : index
    %c0_0 = arith.constant 0 : index
    %0 = vector.load %arg2[%c0, %c0_0] : memref<2x1024xf32, #tpu.memory_space<vmem>>, vector<2x1024xf32>
    %c0_1 = arith.constant 0 : index
    %c0_2 = arith.constant 0 : index
    %1 = vector.load %arg3[%c0_1, %c0_2] : memref<2x1024xf32, #tpu.memory_space<vmem>>, vector<2x1024xf32>
    %c0_3 = arith.constant 0 : index
    %c0_4 = arith.constant 0 : index
    %2 = vector.load %arg4[%c0_3, %c0_4] : memref<1x1024xf32, #tpu.memory_space<vmem>>, vector<1x1024xf32>
    %c0_5 = arith.constant 0 : index
    %c0_6 = arith.constant 0 : index
    %3 = vector.load %arg5[%c0_5, %c0_6] : memref<1x1024xf32, #tpu.memory_space<vmem>>, vector<1x1024xf32>
    %4 = vector.broadcast %2 : vector<1x1024xf32> to vector<2x1024xf32>
    %5 = arith.mulf %0, %4 : vector<2x1024xf32>
    %6 = vector.broadcast %3 : vector<1x1024xf32> to vector<2x1024xf32>
    %7 = arith.mulf %1, %6 : vector<2x1024xf32>
    %8 = arith.subf %5, %7 : vector<2x1024xf32>
    %c0_7 = arith.constant 0 : index
    %c0_8 = arith.constant 0 : index
    %9 = vector.load %arg6[%c0_7, %c0_8] : memref<2x1024xf32, #tpu.memory_space<vmem>>, vector<2x1024xf32>
    tpu.vector_store %arg6[%c0_7, %c0_8], %8 {strides = array<i32>} : memref<2x1024xf32, #tpu.memory_space<vmem>>, vector<2x1024xf32>,
    %10 = vector.broadcast %3 : vector<1x1024xf32> to vector<2x1024xf32>
    %11 = arith.mulf %0, %10 : vector<2x1024xf32>
    %12 = vector.broadcast %2 : vector<1x1024xf32> to vector<2x1024xf32>
    %13 = arith.mulf %1, %12 : vector<2x1024xf32>
    %14 = arith.addf %11, %13 : vector<2x1024xf32>
    %c0_9 = arith.constant 0 : index
    %c0_10 = arith.constant 0 : index
    %15 = vector.load %arg7[%c0_9, %c0_10] : memref<2x1024xf32, #tpu.memory_space<vmem>>, vector<2x1024xf32>
    tpu.vector_store %arg7[%c0_9, %c0_10], %14 {strides = array<i32>} : memref<2x1024xf32, #tpu.memory_space<vmem>>, vector<2x1024xf32>,
    return
  }
  func.func @transform_0(%arg0: i32, %arg1: i32) -> (i32, i32) {
    %c0_i32 = arith.constant 0 : i32
    return %arg0, %arg1 : i32, i32
  }
  func.func @transform_1(%arg0: i32, %arg1: i32) -> (i32, i32) {
    %c0_i32 = arith.constant 0 : i32
    return %arg0, %arg1 : i32, i32
  }
  func.func @transform_2(%arg0: i32, %arg1: i32) -> (i32, i32) {
    %c0_i32 = arith.constant 0 : i32
    %c0_i32_0 = arith.constant 0 : i32
    return %c0_i32, %arg1 : i32, i32
  }
  func.func @transform_3(%arg0: i32, %arg1: i32) -> (i32, i32) {
    %c0_i32 = arith.constant 0 : i32
    %c0_i32_0 = arith.constant 0 : i32
    return %c0_i32, %arg1 : i32, i32
  }
  func.func @transform_4(%arg0: i32, %arg1: i32) -> (i32, i32) {
    %c0_i32 = arith.constant 0 : i32
    return %arg0, %arg1 : i32, i32
  }
  func.func @transform_5(%arg0: i32, %arg1: i32) -> (i32, i32) {
    %c0_i32 = arith.constant 0 : i32
    return %arg0, %arg1 : i32, i32
  }
}

</mosaic_0001>

<llo_original>
// kernel: tpu_custom_call.1
$region0: #{tpu_custom_call.1}
  #allocation0 [shape = 'u32[]', space=smem, size = 0x4, offset = 0x4, fixed_abs, tag = 'smem constant byte address 0x4 - core index']
  #allocation1 [shape = 'u32[72,128]{1,0:T(1,128)}', space=vmem, size = 0x9000, scoped, tag = 'internal scratch']
  %s0 = inlined_call_operand.hbm [shape: f32[2,1024], index: 0, kind: input, shape index: {}]
  %s1 = inlined_call_operand.hbm [shape: f32[2,1024], index: 1, kind: input, shape index: {}]
  %s2 = inlined_call_operand.hbm [shape: f32[1,1024], index: 2, kind: input, shape index: {}]
  %s3 = inlined_call_operand.hbm [shape: f32[1,1024], index: 3, kind: input, shape index: {}]
  %s4 = inlined_call_operand.hbm [shape: f32[2,1024], index: 4, kind: output, shape index: {0}]
  %s5 = inlined_call_operand.hbm [shape: f32[2,1024], index: 5, kind: output, shape index: {1}]
  %6 = xla_tuple %s4, %s5
  %s7 = sld [smem:[#allocation0]]
  $region50: #{tpu_custom_call.1} parent=0
    _
  %s9 = ssub.s32 1, %s7
  %s10 = scalar_select 0, %s9, %s7
  $region1: #{tpu_custom_call.1} parent=0
    #allocation2 [shape = 'u8[8192]{0}', space=vmem, size = 0x2000, scoped, tag = 'input window, operand 0, single buffered']
    #allocation3 [shape = 's32[1]{0}', space=sflag, size = 0x4, scoped, tag = 'scoped memory for tpu_custom_call.1']
    #allocation4 [shape = 's32[1]{0}', space=sflag, size = 0x4, scoped, tag = 'scoped memory for tpu_custom_call.1']
    #allocation5 [shape = 'u8[8192]{0}', space=vmem, size = 0x2000, scoped, tag = 'input window, operand 1, single buffered']
    #allocation6 [shape = 's32[1]{0}', space=sflag, size = 0x4, scoped, tag = 'scoped memory for tpu_custom_call.1']
    #allocation7 [shape = 'u8[4096]{0}', space=vmem, size = 0x1000, scoped, tag = 'input window, operand 2, single buffered']
    #allocation8 [shape = 'u8[4096]{0}', space=vmem, size = 0x1000, scoped, tag = 'input window, operand 3, single buffered']
    #allocation9 [shape = 's32[1]{0}', space=sflag, size = 0x4, scoped, tag = 'scoped memory for tpu_custom_call.1']
    #allocation10 [shape = 'u8[8192]{0}', space=vmem, size = 0x2000, scoped, tag = 'output window, operand 0, single buffered']
    #allocation11 [shape = 'u8[8192]{0}', space=vmem, size = 0x2000, scoped, tag = 'output window, operand 1, single buffered']
    #allocation12 [shape = 's32[1]{0}', space=sflag, size = 0x4, scoped, tag = 'scoped memory for tpu_custom_call.1']
    %11 = vsyncpa [#allocation3], 0
    %12 = vsyncpa [#allocation6], 0
    %13 = vsyncpa [#allocation9], 0
    %14 = vsyncpa [#allocation4], 0
    %15 = vsyncpa [#allocation12], 0
    // Predicated region
    $region2: #{tpu_custom_call.1} parent=1 // pred_check
      _
    $region3: #{tpu_custom_call.1} parent=1 // pred_check_branch
      %17 = sbr.rel (0) target = $region5
    $region4: #{tpu_custom_call.1} parent=1 // pred_region
      %19 = vsyncadd [#allocation3], 0
      %s21 = sshll.u32 %s0, 4
      %s22 = int_to_ptr.hbm [resolvable:$true] %s21
      %s23 = sshll.u32 [#allocation2], 4
      %s24 = int_to_ptr.vmem [resolvable:$true] %s23
      %26 = dma.hbm_to_vmem [thread:$0]  %s22, 256, %s24, [#allocation3]
    $region5: #{tpu_custom_call.1} parent=1 // pred_fallthru
      _
    // Predicated region
    $region6: #{tpu_custom_call.1} parent=1 // pred_check
      _
    $region7: #{tpu_custom_call.1} parent=1 // pred_check_branch
      %28 = sbr.rel (0) target = $region9
    $region8: #{tpu_custom_call.1} parent=1 // pred_region
      %30 = vsyncadd [#allocation6], 0
      %s32 = sshll.u32 %s1, 4
      %s33 = int_to_ptr.hbm [resolvable:$true] %s32
      %s34 = sshll.u32 [#allocation5], 4
      %s35 = int_to_ptr.vmem [resolvable:$true] %s34
      %37 = dma.hbm_to_vmem [thread:$0]  %s33, 256, %s35, [#allocation6]
    $region9: #{tpu_custom_call.1} parent=1 // pred_fallthru
      _
    // Predicated region
    $region10: #{tpu_custom_call.1} parent=1 // pred_check
      _
    $region11: #{tpu_custom_call.1} parent=1 // pred_check_branch
      %39 = sbr.rel (0) target = $region13
    $region12: #{tpu_custom_call.1} parent=1 // pred_region
      %41 = vsyncadd [#allocation6], 0
      %s43 = sshll.u32 %s2, 4
      %s44 = int_to_ptr.hbm [resolvable:$true] %s43
      %s45 = sshll.u32 [#allocation7], 4
      %s46 = int_to_ptr.vmem [resolvable:$true] %s45
      %48 = dma.hbm_to_vmem [thread:$0]  %s44, 128, %s46, [#allocation6]
    $region13: #{tpu_custom_call.1} parent=1 // pred_fallthru
      _
    // Predicated region
    $region14: #{tpu_custom_call.1} parent=1 // pred_check
      _
    $region15: #{tpu_custom_call.1} parent=1 // pred_check_branch
      %50 = sbr.rel (0) target = $region17
    $region16: #{tpu_custom_call.1} parent=1 // pred_region
      %52 = vsyncadd [#allocation9], 0
      %s54 = sshll.u32 %s3, 4
      %s55 = int_to_ptr.hbm [resolvable:$true] %s54
      %s56 = sshll.u32 [#allocation8], 4
      %s57 = int_to_ptr.vmem [resolvable:$true] %s56
      %59 = dma.hbm_to_vmem [thread:$0]  %s55, 128, %s57, [#allocation9]
    $region17: #{tpu_custom_call.1} parent=1 // pred_fallthru
      _
    // Predicated region
    $region18: #{tpu_custom_call.1} parent=1 // pred_check
      _
    $region19: #{tpu_custom_call.1} parent=1 // pred_check_branch
      %61 = sbr.rel (0) target = $region21
    $region20: #{tpu_custom_call.1} parent=1 // pred_region
      %63 = dma.done [#allocation3], 256
    $region21: #{tpu_custom_call.1} parent=1 // pred_fallthru
      _
    // Predicated region
    $region22: #{tpu_custom_call.1} parent=1 // pred_check
      _
    $region23: #{tpu_custom_call.1} parent=1 // pred_check_branch
      %65 = sbr.rel (0) target = $region25
    $region24: #{tpu_custom_call.1} parent=1 // pred_region
      %67 = dma.done [#allocation6], 256
    $region25: #{tpu_custom_call.1} parent=1 // pred_fallthru
      _
    // Predicated region
    $region26: #{tpu_custom_call.1} parent=1 // pred_check
      _
    $region27: #{tpu_custom_call.1} parent=1 // pred_check_branch
      %69 = sbr.rel (0) target = $region29
    $region28: #{tpu_custom_call.1} parent=1 // pred_region
      %71 = dma.done [#allocation6], 128
    $region29: #{tpu_custom_call.1} parent=1 // pred_fallthru
      _
    // Predicated region
    $region30: #{tpu_custom_call.1} parent=1 // pred_check
      _
    $region31: #{tpu_custom_call.1} parent=1 // pred_check_branch
      %73 = sbr.rel (0) target = $region33
    $region32: #{tpu_custom_call.1} parent=1 // pred_region
      %75 = dma.done [#allocation9], 128
    $region33: #{tpu_custom_call.1} parent=1 // pred_fallthru
      _
    %v76 = vld [vmem:[#allocation2] sm:$0xff]
    %v77 = vld [vmem:[#allocation2 + $0x8] sm:$0xff]
    %v78 = vld [vmem:[#allocation5] sm:$0xff]
    %v79 = vld [vmem:[#allocation5 + $0x8] sm:$0xff]
    %v80 = vld [vmem:[#allocation7] sm:$0xff]
    %v81 = vld [vmem:[#allocation8] sm:$0xff]
    %v83 = vperm.slane %v80, 0
    %v84 = vperm.slane %v80, 1
    %v85 = vperm.slane %v80, 2
    %v86 = vperm.slane %v80, 3
    %v87 = vperm.slane %v80, 4
    %v88 = vperm.slane %v80, 5
    %v89 = vperm.slane %v80, 6
    %v90 = vperm.slane %v80, 7
    %v91 = vrot.slane %v84, 6
    %v92 = vrot.slane %v85, 4
    %v93 = vrot.slane %v86, 2
    %v94 = vrot.slane %v88, 6
    %v95 = vrot.slane %v89, 4
    %v96 = vrot.slane %v90, 2
    %vm97 = vcmask 1041408
    %v98 = vsel %vm97, %v83, %v91
    %vm99 = vcmask 1045508
    %v100 = vsel %vm99, %v92, %v93
    %vm101 = vcmask 1043456
    %v102 = vsel %vm101, %v98, %v100
    %v103 = vsel %vm97, %v87, %v94
    %v104 = vsel %vm99, %v95, %v96
    %v105 = vsel %vm101, %v103, %v104
    %v108 = vmul.f32 %v76, %v102
    %v109 = vmul.f32 %v77, %v105
    %v111 = vperm.slane %v81, 0
    %v112 = vperm.slane %v81, 1
    %v113 = vperm.slane %v81, 2
    %v114 = vperm.slane %v81, 3
    %v115 = vperm.slane %v81, 4
    %v116 = vperm.slane %v81, 5
    %v117 = vperm.slane %v81, 6
    %v118 = vperm.slane %v81, 7
    %v119 = vrot.slane %v112, 6
    %v120 = vrot.slane %v113, 4
    %v121 = vrot.slane %v114, 2
    %v122 = vrot.slane %v116, 6
    %v123 = vrot.slane %v117, 4
    %v124 = vrot.slane %v118, 2
    %v125 = vsel %vm97, %v111, %v119
    %v126 = vsel %vm99, %v120, %v121
    %v127 = vsel %vm101, %v125, %v126
    %v128 = vsel %vm97, %v115, %v122
    %v129 = vsel %vm99, %v123, %v124
    %v130 = vsel %vm101, %v128, %v129
    %v133 = vmul.f32 %v78, %v127
    %v134 = vmul.f32 %v79, %v130
    %v135 = vsub.f32 %v108, %v133
    %v136 = vsub.f32 %v109, %v134
    %137 = vst [vmem:[#allocation10] sm:$0xff] %v135
    %138 = vst [vmem:[#allocation10 + $0x8] sm:$0xff] %v136
    %v139 = vmul.f32 %v76, %v127
    %v140 = vmul.f32 %v77, %v130
    %v141 = vmul.f32 %v78, %v102
    %v142 = vmul.f32 %v79, %v105
    %v143 = vadd.f32 %v139, %v141
    %v144 = vadd.f32 %v140, %v142
    %145 = vst [vmem:[#allocation11] sm:$0xff] %v143
    %146 = vst [vmem:[#allocation11 + $0x8] sm:$0xff] %v144
    // Predicated region
    $region34: #{tpu_custom_call.1} parent=1 // pred_check
      _
    $region35: #{tpu_custom_call.1} parent=1 // pred_check_branch
      %148 = sbr.rel (0) target = $region37
    $region36: #{tpu_custom_call.1} parent=1 // pred_region
      %150 = vsyncadd [#allocation4], 0
      %s152 = sshll.u32 [#allocation10], 4
      %s153 = int_to_ptr.vmem [resolvable:$true] %s152
      %s154 = sshll.u32 %s4, 4
      %s155 = int_to_ptr.hbm [resolvable:$true] %s154
      %157 = dma.vmem_to_hbm [thread:$0]  %s153, 256, %s155, [#allocation4]
    $region37: #{tpu_custom_call.1} parent=1 // pred_fallthru
      _
    // Predicated region
    $region38: #{tpu_custom_call.1} parent=1 // pred_check
      _
    $region39: #{tpu_custom_call.1} parent=1 // pred_check_branch
      %159 = sbr.rel (0) target = $region41
    $region40: #{tpu_custom_call.1} parent=1 // pred_region
      %161 = vsyncadd [#allocation12], 0
      %s163 = sshll.u32 [#allocation11], 4
      %s164 = int_to_ptr.vmem [resolvable:$true] %s163
      %s165 = sshll.u32 %s5, 4
      %s166 = int_to_ptr.hbm [resolvable:$true] %s165
      %168 = dma.vmem_to_hbm [thread:$0]  %s164, 256, %s166, [#allocation12]
    $region41: #{tpu_custom_call.1} parent=1 // pred_fallthru
      _
    // Predicated region
    $region42: #{tpu_custom_call.1} parent=1 // pred_check
      _
    $region43: #{tpu_custom_call.1} parent=1 // pred_check_branch
      %170 = sbr.rel (0) target = $region45
    $region44: #{tpu_custom_call.1} parent=1 // pred_region
      %172 = dma.done [#allocation4], 256
    $region45: #{tpu_custom_call.1} parent=1 // pred_fallthru
      _
    // Predicated region
    $region46: #{tpu_custom_call.1} parent=1 // pred_check
      _
    $region47: #{tpu_custom_call.1} parent=1 // pred_check_branch
      %174 = sbr.rel (0) target = $region49
    $region48: #{tpu_custom_call.1} parent=1 // pred_region
      %176 = dma.done [#allocation12], 256
    $region49: #{tpu_custom_call.1} parent=1 // pred_fallthru
      _
    %177 = vsyncpa [#allocation3], 1
    %178 = vsyncpa [#allocation6], 1
    %179 = vsyncpa [#allocation9], 1
    %180 = vsyncpa [#allocation4], 1
    %181 = vsyncpa [#allocation12], 1

</llo_original>
